<compile_context>
chip_gen: v5e
topology: v5e:2x2
jax: 0.10.0
libtpu: 0.0.40
codegen_flags: <defaults>
</compile_context>

<pallas_src>
import jax
import jax.numpy as jnp
from jax.experimental import pallas as pl
from jax.experimental.pallas import tpu as pltpu


# --------------------------------------------------------------------------- #
# Trace-time helpers (plain Python on static shapes).                          #
# --------------------------------------------------------------------------- #
def _cdiv(a, b):
    return -(-a // b)


def _round_up(a, b):
    return _cdiv(a, b) * b


def _vmem_capacity_bytes():
    """Per-core VMEM capacity; conservative 64 MiB (v7x) fallback."""
    try:
        return int(pltpu.get_tpu_info().vmem_capacity_bytes)
    except Exception:
        return 64 * 1024 * 1024


def _num_tensorcores():
    """2 on chips where one JAX device spans two TensorCores (v4/v5p/v7x), else 1."""
    try:
        kind = jax.devices()[0].device_kind.lower()
    except Exception:
        return 1
    if ("lite" in kind) or ("v5e" in kind) or ("v6" in kind):
        return 1
    if ("v4" in kind) or ("v5p" in kind) or ("v7" in kind) or ("7x" in kind):
        return 2
    return 1


def _choose_row_split(nc, s, *, min_subrow=1024, max_rows=1024):
    """Pick R | S so rows = NC*R fills the 8 sublanes (exact: row sums re-add)."""
    def occ(rows):
        return rows / _round_up(rows, 8)

    if nc % 8 == 0 or s < 2 * min_subrow:
        return 1
    best_r, best_occ = 1, occ(nc)
    r = 2
    while r * nc <= max_rows and s // r >= min_subrow:
        if s % r == 0 and occ(nc * r) > best_occ + 1e-9:
            best_r, best_occ = r, occ(nc * r)
            if best_occ >= 1.0 - 1e-9:
                break
        r += 1
    return best_r


def _choose_tile(rows, s_row, in_itemsize, vmem_cap, max_spatial_tile,
                 *, max_lanes=512 * 128):
    """Largest lane-aligned spatial tile whose double-buffered inputs fit VMEM."""
    budget = vmem_cap // 2                       # 2 inputs x 2 pipeline buffers ~ half VMEM
    tile = budget // (2 * rows * in_itemsize)
    tile = max(128, (tile // 128) * 128)
    tile = min(tile, (s_row // 128) * 128)       # keep the block inside the array (s_row >= 128)
    tile = min(tile, max_lanes)                  # bounds the statically-unrolled chunk loop
    if max_spatial_tile is not None:
        tile = min(tile, max(128, (int(max_spatial_tile) // 128) * 128))
    return max(tile, 128)


def _fold_width(tile):
    """Lane width of the in-kernel partial accumulators (multiple of 128, divides tile)."""
    for f in (512, 256, 128):
        if tile % f == 0:
            return f
    return 128


# --------------------------------------------------------------------------- #
# Kernel.                                                                      #
# --------------------------------------------------------------------------- #
def _accum_block(p_ref, t_ref, inter_ref, sq_ref, rows, fold, n_chunks, partial):
    """Accumulate sum(p*t) and sum(p^2 + t^2) for one spatial block.

    Processes the block in `fold`-lane chunks (static, lane-aligned slices) so the
    partials stay lane-dense (rows, fold): no per-step cross-lane (XLU) reduce,
    unmasked accumulator stores, tiny f32 cast temporaries for bf16 inputs.
    `partial` > 0 masks the trailing ragged chunk (in-kernel tail handling, no pad).
    """
    pt = jnp.zeros((rows, fold), jnp.float32)
    sq = jnp.zeros((rows, fold), jnp.float32)
    for j in range(n_chunks):
        lo = j * fold
        pj = p_ref[:, lo:lo + fold].astype(jnp.float32)
        tj = t_ref[:, lo:lo + fold].astype(jnp.float32)
        pt = pt + pj * tj
        sq = sq + pj * pj + tj * tj
    if partial:
        lo = n_chunks * fold
        valid = jax.lax.broadcasted_iota(jnp.int32, (rows, fold), 1) < partial
        pj = jnp.where(valid, p_ref[:, lo:lo + fold].astype(jnp.float32), 0.0)
        tj = jnp.where(valid, t_ref[:, lo:lo + fold].astype(jnp.float32), 0.0)
        pt = pt + pj * tj
        sq = sq + pj * pj + tj * tj
    inter_ref[...] += pt[None]
    sq_ref[...] += sq[None]


def _build_kernel(*, rows, tile, fold, n_blocks, n_per_part, rem, gate_oob):
    n_full_chunks = tile // fold
    tail_chunks = rem // fold          # fully valid chunks inside the ragged tail block
    tail_partial = rem % fold          # valid lanes of its last (masked) chunk

    def kernel(p_ref, t_ref, inter_ref, sq_ref):
        s = pl.program_id(1)

        @pl.when(s == 0)
        def _init():
            inter_ref[...] = jnp.zeros_like(inter_ref)
            sq_ref[...] = jnp.zeros_like(sq_ref)

        g = pl.program_id(0) * n_per_part + s   # global spatial block index

        def full_block():
            _accum_block(p_ref, t_ref, inter_ref, sq_ref, rows, fold, n_full_chunks, 0)

        def tail_block():
            _accum_block(p_ref, t_ref, inter_ref, sq_ref, rows, fold, tail_chunks, tail_partial)

        if rem == 0:
            if gate_oob:
                pl.when(g < n_blocks)(full_block)
            else:
                full_block()
        elif n_blocks == 1:
            tail_block()               # single (ragged) block, single grid step
        else:
            pl.when(g < n_blocks - 1)(full_block)
            pl.when(g == n_blocks - 1)(tail_block)
            # g >= n_blocks (padded grid steps when P doesn't divide n_blocks): no-op.

    return kernel


# --------------------------------------------------------------------------- #
# Wrapper.                                                                     #
# --------------------------------------------------------------------------- #
def jaccard_loss(pred, target, *, max_spatial_tile=None, force_partitions=None):
    """Pallas TPU implementation of JaccardLoss.forward (smooth = 1).

    pred / target: [N, C, D, H, W].  bf16 inputs are supported (f32 accumulation).
    """
    assert pred.shape == target.shape and pred.ndim == 5, "expect [N, C, D, H, W]"
    N, C, D, H, W = pred.shape
    S = D * H * W
    NC = N * C
    smooth = 1.0

    # Fill the 8 sublanes when NC is not a multiple of 8 by splitting each (n, c)
    # row into R contiguous sub-rows (exact: sub-row sums are re-added below).
    R = _choose_row_split(NC, S)
    rows = NC * R
    s_row = S // R

    # Free, contiguous reshape; no HBM copy.
    p2 = pred.reshape(rows, s_row)
    t2 = target.reshape(rows, s_row)

    # Tiny-volume guard: keep the lane axis at least one 128-lane vreg wide.
    # (Real volumes never hit this; zero padding is exact for both sums.)
    if s_row < 128:
        p2 = jnp.pad(p2, ((0, 0), (0, 128 - s_row)))
        t2 = jnp.pad(t2, ((0, 0), (0, 128 - s_row)))
        s_row = 128

    isz = pred.dtype.itemsize + target.dtype.itemsize   # bytes/lane across both inputs
    vmem_cap = _vmem_capacity_bytes()
    tile = _choose_tile(rows, s_row, isz, vmem_cap, max_spatial_tile)
    fold = _fold_width(tile)
    n_blocks = _cdiv(s_row, tile)
    rem = s_row % tile                                   # ragged tail handled in-kernel

    # Split spatial blocks across TensorCores only where one device has >1 TC
    # (v4/v5p/v7x); on v5e/v6e this stays a single clean reduction loop.
    P = force_partitions if force_partitions is not None else _num_tensorcores()
    P = max(1, min(int(P), n_blocks))
    n_per_part = _cdiv(n_blocks, P)
    gate_oob = P * n_per_part > n_blocks

    if gate_oob:
        def in_idx(p, s):
            return (0, jnp.minimum(p * n_per_part + s, n_blocks - 1))
    else:
        def in_idx(p, s):
            return (0, p * n_per_part + s)

    in_spec = pl.BlockSpec((rows, tile), in_idx)
    acc_spec = pl.BlockSpec((1, rows, fold), lambda p, s: (p, 0, 0))
    out_sd = jax.ShapeDtypeStruct((P, rows, fold), jnp.float32)

    # Double-buffered input blocks dominate the VMEM footprint; fold-chunked compute
    # keeps f32 cast temporaries to (rows, fold).  Cap well under the physical VMEM.
    in_buf_bytes = 2 * rows * tile * isz
    vmem_limit = int(min(max(in_buf_bytes + (8 << 20), 32 << 20), (vmem_cap * 15) // 16))

    kernel = _build_kernel(rows=rows, tile=tile, fold=fold, n_blocks=n_blocks,
                           n_per_part=n_per_part, rem=rem, gate_oob=gate_oob)

    inter, sq = pl.pallas_call(
        kernel,
        out_shape=(out_sd, out_sd),
        grid=(P, n_per_part),
        in_specs=[in_spec, in_spec],
        out_specs=(acc_spec, acc_spec),
        compiler_params=pltpu.CompilerParams(
            dimension_semantics=("parallel", "arbitrary"),
            vmem_limit_bytes=vmem_limit,
        ),
    )(p2, t2)

    # Tiny per-(N, C) combine in plain JAX: fold partition + lane partials,
    # re-add the R sub-rows, then ratio / channel mean / (1 - x) / clamp.
    inter = jnp.sum(inter, axis=(0, 2)).reshape(N, C, R).sum(axis=-1)
    sq = jnp.sum(sq, axis=(0, 2)).reshape(N, C, R).sum(axis=-1)
    # sq = sum(p^2) + sum(t^2)  =>  denominator = sq - inter + smooth.
    jaccard = jnp.sum(inter / (sq - inter + smooth), axis=1) / C
    return jnp.clip(jnp.mean(1.0 - jaccard), 0.0, 1.0)


# --------------------------------------------------------------------------- #
# Pure-JAX reference mirroring the PyTorch forward exactly.                    #
# --------------------------------------------------------------------------- #
def _reference_jaccard_loss(pred, target):
    smooth = 1.0
    C = pred.shape[1]
    jaccard = 0.0
    for i in range(C):
        p = pred[:, i]
        t = target[:, i]
        inter = (p * t).sum(axis=(1, 2, 3))
        jaccard = jaccard + inter / (
            (p ** 2).sum(axis=(1, 2, 3)) + (t ** 2).sum(axis=(1, 2, 3)) - inter + smooth
        )
    jaccard = jaccard / C
    return jnp.clip(jnp.mean(1.0 - jaccard), 0.0, 1.0)


if __name__ == "__main__":
    key = jax.random.PRNGKey(0)

    cases = [
        # (shape [N, C, D, H, W], max_spatial_tile, force_partitions, dtype, tol)
        ((2, 4, 4, 8, 8), None, None, jnp.float32, 1e-5),    # single block, budget tile
        ((2, 4, 4, 8, 8), 128, 2, jnp.float32, 1e-5),         # 2 blocks split over 2 partitions
        ((2, 4, 5, 8, 8), 128, None, jnp.float32, 1e-5),      # ragged tail (masked in-kernel)
        ((2, 4, 5, 8, 8), 128, 2, jnp.float32, 1e-5),          # ragged tail + padded grid step
        ((2, 3, 3, 5, 7), None, None, jnp.float32, 1e-5),      # S < 128 lane-pad guard path
        ((1, 4, 8, 16, 16), None, None, jnp.float32, 1e-5),    # row-split path (NC=4 -> rows=8)
        ((2, 4, 5, 8, 8), 128, None, jnp.bfloat16, 1e-4),      # bf16 inputs, f32 accumulation
    ]

    for shape, max_tile, force_p, dtype, tol in cases:
        key, k1, k2 = jax.random.split(key, 3)
        pred = jax.nn.softmax(jax.random.normal(k1, shape, jnp.float32), axis=1).astype(dtype)
        target = (jax.random.uniform(k2, shape, jnp.float32) > 0.5).astype(dtype)

        loss = jax.block_until_ready(
            jaccard_loss(pred, target, max_spatial_tile=max_tile, force_partitions=force_p))
        ref = jax.block_until_ready(
            _reference_jaccard_loss(pred.astype(jnp.float32), target.astype(jnp.float32)))
        assert jnp.allclose(loss, ref, atol=tol, rtol=tol), (
            shape, max_tile, force_p, str(dtype), float(loss), float(ref))

    print("KERNEL_OK")
</pallas_src>

<mosaic_0001>
module attributes {stable_mosaic.version = 11 : i64} {
  func.func @kernel(%arg0: i32, %arg1: i32, %arg2: memref<8x256xf32, #tpu.memory_space<vmem>>, %arg3: memref<8x256xf32, #tpu.memory_space<vmem>>, %arg4: memref<1x8x256xf32, #tpu.memory_space<vmem>>, %arg5: memref<1x8x256xf32, #tpu.memory_space<vmem>>) attributes {dimension_semantics = [#tpu.dimension_semantics<parallel>, #tpu.dimension_semantics<arbitrary>], iteration_bounds = array<i64: 1, 1>, scalar_prefetch = 0 : i64, scratch_operands = 0 : i64, tpu.core_type = #tpu.core_type<tc>, window_params = [{transform_indices = @transform_0, window_bounds = array<i64: 8, 256>}, {transform_indices = @transform_1, window_bounds = array<i64: 8, 256>}, {transform_indices = @transform_2, window_bounds = array<i64: 1, 8, 256>}, {transform_indices = @transform_3, window_bounds = array<i64: 1, 8, 256>}]} {
    %c0_i32 = arith.constant 0 : i32
    %0 = arith.cmpi eq, %arg1, %c0_i32 : i32
    %1 = arith.extui %0 : i1 to i32
    %c0_i32_0 = arith.constant 0 : i32
    %2 = arith.cmpi ne, %1, %c0_i32_0 : i32
    scf.if %2 {
      %cst_17 = arith.constant 0.000000e+00 : f32
      %21 = vector.broadcast %cst_17 : f32 to vector<1x8x256xf32>
      %c0_18 = arith.constant 0 : index
      %c0_19 = arith.constant 0 : index
      %c0_20 = arith.constant 0 : index
      %22 = vector.load %arg4[%c0_18, %c0_19, %c0_20] : memref<1x8x256xf32, #tpu.memory_space<vmem>>, vector<1x8x256xf32>
      tpu.vector_store %arg4[%c0_18, %c0_19, %c0_20], %21 {strides = array<i32>} : memref<1x8x256xf32, #tpu.memory_space<vmem>>, vector<1x8x256xf32>,
      %cst_21 = arith.constant 0.000000e+00 : f32
      %23 = vector.broadcast %cst_21 : f32 to vector<1x8x256xf32>
      %c0_22 = arith.constant 0 : index
      %c0_23 = arith.constant 0 : index
      %c0_24 = arith.constant 0 : index
      %24 = vector.load %arg5[%c0_22, %c0_23, %c0_24] : memref<1x8x256xf32, #tpu.memory_space<vmem>>, vector<1x8x256xf32>
      tpu.vector_store %arg5[%c0_22, %c0_23, %c0_24], %23 {strides = array<i32>} : memref<1x8x256xf32, #tpu.memory_space<vmem>>, vector<1x8x256xf32>,
    } else {
    }
    %cst = arith.constant 0.000000e+00 : f32
    %3 = vector.broadcast %cst : f32 to vector<8x256xf32>
    %cst_1 = arith.constant 0.000000e+00 : f32
    %4 = vector.broadcast %cst_1 : f32 to vector<8x256xf32>
    %c0 = arith.constant 0 : index
    %c0_2 = arith.constant 0 : index
    %5 = vector.load %arg2[%c0, %c0_2] : memref<8x256xf32, #tpu.memory_space<vmem>>, vector<8x256xf32>
    %c0_3 = arith.constant 0 : index
    %c0_4 = arith.constant 0 : index
    %6 = vector.load %arg3[%c0_3, %c0_4] : memref<8x256xf32, #tpu.memory_space<vmem>>, vector<8x256xf32>
    %7 = arith.mulf %5, %6 : vector<8x256xf32>
    %8 = arith.addf %3, %7 : vector<8x256xf32>
    %9 = arith.mulf %5, %5 : vector<8x256xf32>
    %10 = arith.addf %4, %9 : vector<8x256xf32>
    %11 = arith.mulf %6, %6 : vector<8x256xf32>
    %12 = arith.addf %10, %11 : vector<8x256xf32>
    %c0_5 = arith.constant 0 : index
    %c0_6 = arith.constant 0 : index
    %c0_7 = arith.constant 0 : index
    %13 = vector.load %arg4[%c0_5, %c0_6, %c0_7] : memref<1x8x256xf32, #tpu.memory_space<vmem>>, vector<1x8x256xf32>
    %14 = vector.shape_cast %8 : vector<8x256xf32> to vector<1x8x256xf32>
    %15 = arith.addf %13, %14 : vector<1x8x256xf32>
    %c0_8 = arith.constant 0 : index
    %c0_9 = arith.constant 0 : index
    %c0_10 = arith.constant 0 : index
    %16 = vector.load %arg4[%c0_8, %c0_9, %c0_10] : memref<1x8x256xf32, #tpu.memory_space<vmem>>, vector<1x8x256xf32>
    tpu.vector_store %arg4[%c0_8, %c0_9, %c0_10], %15 {strides = array<i32>} : memref<1x8x256xf32, #tpu.memory_space<vmem>>, vector<1x8x256xf32>,
    %c0_11 = arith.constant 0 : index
    %c0_12 = arith.constant 0 : index
    %c0_13 = arith.constant 0 : index
    %17 = vector.load %arg5[%c0_11, %c0_12, %c0_13] : memref<1x8x256xf32, #tpu.memory_space<vmem>>, vector<1x8x256xf32>
    %18 = vector.shape_cast %12 : vector<8x256xf32> to vector<1x8x256xf32>
    %19 = arith.addf %17, %18 : vector<1x8x256xf32>
    %c0_14 = arith.constant 0 : index
    %c0_15 = arith.constant 0 : index
    %c0_16 = arith.constant 0 : index
    %20 = vector.load %arg5[%c0_14, %c0_15, %c0_16] : memref<1x8x256xf32, #tpu.memory_space<vmem>>, vector<1x8x256xf32>
    tpu.vector_store %arg5[%c0_14, %c0_15, %c0_16], %19 {strides = array<i32>} : memref<1x8x256xf32, #tpu.memory_space<vmem>>, vector<1x8x256xf32>,
    return
  }
  func.func @transform_0(%arg0: i32, %arg1: i32) -> (i32, i32) {
    %c1_i32 = arith.constant 1 : i32
    %0 = arith.muli %arg0, %c1_i32 : i32
    %1 = arith.addi %0, %arg1 : i32
    %c0_i32 = arith.constant 0 : i32
    %c0_i32_0 = arith.constant 0 : i32
    return %c0_i32, %1 : i32, i32
  }
  func.func @transform_1(%arg0: i32, %arg1: i32) -> (i32, i32) {
    %c1_i32 = arith.constant 1 : i32
    %0 = arith.muli %arg0, %c1_i32 : i32
    %1 = arith.addi %0, %arg1 : i32
    %c0_i32 = arith.constant 0 : i32
    %c0_i32_0 = arith.constant 0 : i32
    return %c0_i32, %1 : i32, i32
  }
  func.func @transform_2(%arg0: i32, %arg1: i32) -> (i32, i32, i32) {
    %c0_i32 = arith.constant 0 : i32
    %c0_i32_0 = arith.constant 0 : i32
    %c0_i32_1 = arith.constant 0 : i32
    return %arg0, %c0_i32, %c0_i32_0 : i32, i32, i32
  }
  func.func @transform_3(%arg0: i32, %arg1: i32) -> (i32, i32, i32) {
    %c0_i32 = arith.constant 0 : i32
    %c0_i32_0 = arith.constant 0 : i32
    %c0_i32_1 = arith.constant 0 : i32
    return %arg0, %c0_i32, %c0_i32_0 : i32, i32, i32
  }
}

</mosaic_0001>

<llo_original>
// kernel: tpu_custom_call.1
$region0: #{tpu_custom_call.1}
  #allocation0 [shape = 'u32[]', space=smem, size = 0x4, offset = 0x4, fixed_abs, tag = 'smem constant byte address 0x4 - core index']
  #allocation1 [shape = 'u32[72,128]{1,0:T(1,128)}', space=vmem, size = 0x9000, scoped, tag = 'internal scratch']
  %s0 = inlined_call_operand.hbm [shape: f32[8,256], index: 0, kind: input, shape index: {}]
  %s1 = inlined_call_operand.hbm [shape: f32[8,256], index: 1, kind: input, shape index: {}]
  %s2 = inlined_call_operand.hbm [shape: f32[1,8,256], index: 2, kind: output, shape index: {0}]
  %s3 = inlined_call_operand.hbm [shape: f32[1,8,256], index: 3, kind: output, shape index: {1}]
  %4 = xla_tuple %s2, %s3
  %s5 = sld [smem:[#allocation0]]
  $region38: #{tpu_custom_call.1} parent=0
    _
  %s7 = ssub.s32 1, %s5
  %s8 = scalar_select 0, %s7, %s5
  $region1: #{tpu_custom_call.1} parent=0
    #allocation2 [shape = 'u8[8192]{0}', space=vmem, size = 0x2000, scoped, tag = 'input window, operand 0, single buffered']
    #allocation3 [shape = 's32[1]{0}', space=sflag, size = 0x4, scoped, tag = 'scoped memory for tpu_custom_call.1']
    #allocation4 [shape = 's32[1]{0}', space=sflag, size = 0x4, scoped, tag = 'scoped memory for tpu_custom_call.1']
    #allocation5 [shape = 'u8[8192]{0}', space=vmem, size = 0x2000, scoped, tag = 'input window, operand 1, single buffered']
    #allocation6 [shape = 's32[1]{0}', space=sflag, size = 0x4, scoped, tag = 'scoped memory for tpu_custom_call.1']
    #allocation7 [shape = 'u8[8192]{0}', space=vmem, size = 0x2000, scoped, tag = 'output window, operand 0, single buffered']
    #allocation8 [shape = 'u8[8192]{0}', space=vmem, size = 0x2000, scoped, tag = 'output window, operand 1, single buffered']
    #allocation9 [shape = 's32[1]{0}', space=sflag, size = 0x4, scoped, tag = 'scoped memory for tpu_custom_call.1']
    %9 = vsyncpa [#allocation3], 0
    %10 = vsyncpa [#allocation6], 0
    %11 = vsyncpa [#allocation4], 0
    %12 = vsyncpa [#allocation9], 0
    // Predicated region
    $region2: #{tpu_custom_call.1} parent=1 // pred_check
      _
    $region3: #{tpu_custom_call.1} parent=1 // pred_check_branch
      %14 = sbr.rel (0) target = $region5
    $region4: #{tpu_custom_call.1} parent=1 // pred_region
      %s15 = sadd.s32 0, 0
      %s16 = smul.u32 2, %s15
      %18 = vsyncadd [#allocation3], 0
      %s19 = smul.addr %s16, 8
      %s20 = scalar_lea.hbm %s0, %s19
      %s22 = sshll.u32 %s20, 4
      %s23 = int_to_ptr.hbm [resolvable:$true] %s22
      %s24 = sshll.u32 [#allocation2], 4
      %s25 = int_to_ptr.vmem [resolvable:$true] %s24
      %27 = dma.hbm_to_vmem [thread:$0]  %s23, 256, %s25, [#allocation3]
    $region5: #{tpu_custom_call.1} parent=1 // pred_fallthru
      _
    // Predicated region
    $region6: #{tpu_custom_call.1} parent=1 // pred_check
      _
    $region7: #{tpu_custom_call.1} parent=1 // pred_check_branch
      %29 = sbr.rel (0) target = $region9
    $region8: #{tpu_custom_call.1} parent=1 // pred_region
      %s30 = sadd.s32 0, 0
      %s31 = smul.u32 2, %s30
      %33 = vsyncadd [#allocation6], 0
      %s34 = smul.addr %s31, 8
      %s35 = scalar_lea.hbm %s1, %s34
      %s37 = sshll.u32 %s35, 4
      %s38 = int_to_ptr.hbm [resolvable:$true] %s37
      %s39 = sshll.u32 [#allocation5], 4
      %s40 = int_to_ptr.vmem [resolvable:$true] %s39
      %42 = dma.hbm_to_vmem [thread:$0]  %s38, 256, %s40, [#allocation6]
    $region9: #{tpu_custom_call.1} parent=1 // pred_fallthru
      _
    // Predicated region
    $region10: #{tpu_custom_call.1} parent=1 // pred_check
      _
    $region11: #{tpu_custom_call.1} parent=1 // pred_check_branch
      %44 = sbr.rel (0) target = $region13
    $region12: #{tpu_custom_call.1} parent=1 // pred_region
      %46 = dma.done [#allocation3], 256
    $region13: #{tpu_custom_call.1} parent=1 // pred_fallthru
      _
    // Predicated region
    $region14: #{tpu_custom_call.1} parent=1 // pred_check
      _
    $region15: #{tpu_custom_call.1} parent=1 // pred_check_branch
      %48 = sbr.rel (0) target = $region17
    $region16: #{tpu_custom_call.1} parent=1 // pred_region
      %50 = dma.done [#allocation6], 256
    $region17: #{tpu_custom_call.1} parent=1 // pred_fallthru
      _
    %s51 = sadd.s32 0, 0
    %s52 = smul.u32 2, %s51
    %s53 = sadd.s32 0, 0
    %s54 = smul.u32 2, %s53
    %p55 = scmp.eq.s32.totalorder 0, 0
    // Predicated region
    $region18: #{tpu_custom_call.1} parent=1 // pred_check
      %p56 = pneg %p55
    $region19: #{tpu_custom_call.1} parent=1 // pred_check_branch
      %58 = sbr.rel (%p56) target = $region21
    $region20: #{tpu_custom_call.1} parent=1 // pred_region
      %59 = vst [vmem:[#allocation7] sm:$0xff] 0.0
      %60 = vst [vmem:[#allocation7 + $0x8] sm:$0xff] 0.0
      %61 = vst [vmem:[#allocation8] sm:$0xff] 0.0
      %62 = vst [vmem:[#allocation8 + $0x8] sm:$0xff] 0.0
    $region21: #{tpu_custom_call.1} parent=1 // pred_fallthru
      _
    %v63 = vld [vmem:[#allocation2] sm:$0xff]
    %v64 = vld [vmem:[#allocation2 + $0x8] sm:$0xff]
    %v65 = vld [vmem:[#allocation5] sm:$0xff]
    %v66 = vld [vmem:[#allocation5 + $0x8] sm:$0xff]
    %v67 = vmul.f32 %v63, %v65
    %v68 = vmul.f32 %v64, %v66
    %v69 = vadd.f32 %v67, 0.0
    %v70 = vadd.f32 %v68, 0.0
    %v71 = vmul.f32 %v63, %v63
    %v72 = vmul.f32 %v64, %v64
    %v73 = vadd.f32 %v71, 0.0
    %v74 = vadd.f32 %v72, 0.0
    %v75 = vmul.f32 %v65, %v65
    %v76 = vmul.f32 %v66, %v66
    %v77 = vadd.f32 %v73, %v75
    %v78 = vadd.f32 %v74, %v76
    %v79 = vld [vmem:[#allocation7] sm:$0xff]
    %v80 = vld [vmem:[#allocation7 + $0x8] sm:$0xff]
    %v81 = vadd.f32 %v79, %v69
    %v82 = vadd.f32 %v80, %v70
    %83 = vst [vmem:[#allocation7] sm:$0xff] %v81
    %84 = vst [vmem:[#allocation7 + $0x8] sm:$0xff] %v82
    %v85 = vld [vmem:[#allocation8] sm:$0xff]
    %v86 = vld [vmem:[#allocation8 + $0x8] sm:$0xff]
    %v87 = vadd.f32 %v85, %v77
    %v88 = vadd.f32 %v86, %v78
    %89 = vst [vmem:[#allocation8] sm:$0xff] %v87
    %90 = vst [vmem:[#allocation8 + $0x8] sm:$0xff] %v88
    // Predicated region
    $region22: #{tpu_custom_call.1} parent=1 // pred_check
      _
    $region23: #{tpu_custom_call.1} parent=1 // pred_check_branch
      %92 = sbr.rel (0) target = $region25
    $region24: #{tpu_custom_call.1} parent=1 // pred_region
      %94 = vsyncadd [#allocation4], 0
      %s96 = sshll.u32 [#allocation7], 4
      %s97 = int_to_ptr.vmem [resolvable:$true] %s96
      %s98 = sshll.u32 %s2, 4
      %s99 = int_to_ptr.hbm [resolvable:$true] %s98
      %101 = dma.vmem_to_hbm [thread:$0]  %s97, 256, %s99, [#allocation4]
    $region25: #{tpu_custom_call.1} parent=1 // pred_fallthru
      _
    // Predicated region
    $region26: #{tpu_custom_call.1} parent=1 // pred_check
      _
    $region27: #{tpu_custom_call.1} parent=1 // pred_check_branch
      %103 = sbr.rel (0) target = $region29
    $region28: #{tpu_custom_call.1} parent=1 // pred_region
      %105 = vsyncadd [#allocation9], 0
      %s107 = sshll.u32 [#allocation8], 4
      %s108 = int_to_ptr.vmem [resolvable:$true] %s107
      %s109 = sshll.u32 %s3, 4
      %s110 = int_to_ptr.hbm [resolvable:$true] %s109
      %112 = dma.vmem_to_hbm [thread:$0]  %s108, 256, %s110, [#allocation9]
    $region29: #{tpu_custom_call.1} parent=1 // pred_fallthru
      _
    // Predicated region
    $region30: #{tpu_custom_call.1} parent=1 // pred_check
      _
    $region31: #{tpu_custom_call.1} parent=1 // pred_check_branch
      %114 = sbr.rel (0) target = $region33
    $region32: #{tpu_custom_call.1} parent=1 // pred_region
      %116 = dma.done [#allocation4], 256
    $region33: #{tpu_custom_call.1} parent=1 // pred_fallthru
      _
    // Predicated region
    $region34: #{tpu_custom_call.1} parent=1 // pred_check
      _
    $region35: #{tpu_custom_call.1} parent=1 // pred_check_branch
      %118 = sbr.rel (0) target = $region37
    $region36: #{tpu_custom_call.1} parent=1 // pred_region
      %120 = dma.done [#allocation9], 256
    $region37: #{tpu_custom_call.1} parent=1 // pred_fallthru
      _
    %121 = vsyncpa [#allocation3], 1
    %122 = vsyncpa [#allocation6], 1
    %123 = vsyncpa [#allocation4], 1
    %124 = vsyncpa [#allocation9], 1

</llo_original>
